<compile_context>
chip_gen: v6e
topology: v6e:2x2x1
jax: 0.10.0
libtpu: 0.0.40
codegen_flags: <defaults>
</compile_context>

<pallas_src>
import functools

import jax
import jax.numpy as jnp
import numpy as np
from jax.experimental import pallas as pl
from jax.experimental.pallas import tpu as pltpu


def _router_kernel(x_ref, w_ref, b_ref, c_ref, probs_ref, idx_ref, *, top_k):
    # ---- projection on the MXU (f32 operands, f32 accumulation) -------------
    x = x_ref[...].astype(jnp.float32)                           # (TM, Din)
    x_proj = jnp.dot(x, w_ref[...],
                     preferred_element_type=jnp.float32)         # (TM, E)
    x_proj = x_proj + b_ref[...]                                 # + bias (1, E)

    # ---- row L2 normalize via rsqrt; eps^2 matches torch's 1e-12 ------------
    ss = jnp.sum(x_proj * x_proj, axis=-1, keepdims=True)        # (TM, 1)
    x_n = x_proj * jax.lax.rsqrt(jnp.maximum(ss, 1e-24))         # (TM, E)

    # ---- cosine similarity, transposed: experts on the sublane axis ---------
    # simT = c_n @ x_n^T -> (C, TM); centers pre-normalized in the wrapper.
    sim = jax.lax.dot_general(
        c_ref[...], x_n,
        dimension_numbers=(((1,), (1,)), ((), ())),
        preferred_element_type=jnp.float32)                      # (C, TM)

    n_experts, tm = sim.shape
    row_ids = jax.lax.broadcasted_iota(jnp.int32, (n_experts, tm), 0)

    # ---- iterative top-k along the expert (sublane) axis ---------------------
    # Values come out in descending order; ties break to the lowest index.
    vals = sim
    top_vals, top_idx = [], []
    for _ in range(top_k):
        m = jnp.max(vals, axis=0, keepdims=True)                 # (1, TM)
        is_max = vals >= m
        sel = jnp.min(jnp.where(is_max, row_ids, n_experts),
                      axis=0, keepdims=True)                     # (1, TM)
        top_vals.append(m)
        top_idx.append(sel)
        vals = jnp.where(row_ids == sel, -jnp.inf, vals)

    tv = jnp.concatenate(top_vals, axis=0)                       # (K, TM) f32
    ti = jnp.concatenate(top_idx, axis=0)                        # (K, TM) i32

    # ---- softmax over the K selected scores (exact divide) -------------------
    # tv[0] is already the per-column max (descending order).
    e = jnp.exp(tv - tv[0:1, :])
    probs = e / jnp.sum(e, axis=0, keepdims=True)

    # Lane-dense stores: last dim is TM (full-width vst, no 2/128 lane mask).
    probs_ref[...] = probs
    idx_ref[...] = ti


@functools.partial(jax.jit, static_argnames=("top_k",))
def cosine_router(x, w, b, centers, *, top_k):
    """x: (bs, num_channels, time_dim*2). Returns (probs, indices), each
    shaped (bs, num_channels, top_k)."""
    bs, nc, din = x.shape
    M = bs * nc
    E = w.shape[1]
    C = centers.shape[0]
    if top_k > C:
        raise ValueError(f"top_k={top_k} exceeds number of experts C={C}")

    # Constant per call (hoisted out of the grid loop, fused under jit):
    # normalize expert centers once in f32 with torch's eps.
    c32 = centers.astype(jnp.float32)
    c_n = c32 / jnp.maximum(jnp.linalg.norm(c32, axis=-1, keepdims=True), 1e-12)

    w32 = w.astype(jnp.float32)
    b2 = b.reshape(1, E).astype(jnp.float32)
    x2 = x.reshape(M, din)

    # ---- row-tile size -------------------------------------------------------
    # Per-grid-step overhead is ~0.35us, so each tile must carry enough HBM
    # traffic to amortize it.  Budget ~4 MiB for the double-buffered x tile
    # (rows lane-pad to >=128 lanes in VMEM); with the handful of (TM, E) f32
    # intermediates this stays well under v7x's 32 MiB scoped-VMEM default
    # (64 MiB physical); v5e/v6e (128 MiB) have even more headroom.
    padded_row_bytes = max(din, 128) * x.dtype.itemsize
    tm_cap = max(128, ((4 << 20) // (2 * padded_row_bytes)) // 128 * 128)
    tm_cap = min(tm_cap, 8192)
    if M < 256:
        TM = M                       # single full-extent tile (always legal)
    else:
        # Keep the grid at >=4 steps so v7x's two TensorCores both get work
        # and the DMA pipeline has something to double-buffer.
        quarter = max(128, (pl.cdiv(M, 4) // 128) * 128)
        TM = min(tm_cap, quarter)
    grid = (pl.cdiv(M, TM),)

    kernel = functools.partial(_router_kernel, top_k=top_k)
    probs_t, idx_t = pl.pallas_call(
        kernel,
        out_shape=(
            jax.ShapeDtypeStruct((top_k, M), jnp.float32),
            jax.ShapeDtypeStruct((top_k, M), jnp.int32),
        ),
        grid=grid,
        in_specs=[
            pl.BlockSpec((TM, din), lambda i: (i, 0)),   # x rows (pipelined)
            pl.BlockSpec((din, E), lambda i: (0, 0)),    # W     (resident)
            pl.BlockSpec((1, E), lambda i: (0, 0)),      # bias  (resident)
            pl.BlockSpec((C, E), lambda i: (0, 0)),      # c_n   (resident)
        ],
        out_specs=(
            pl.BlockSpec((top_k, TM), lambda i: (0, i)),
            pl.BlockSpec((top_k, TM), lambda i: (0, i)),
        ),
        compiler_params=pltpu.CompilerParams(
            dimension_semantics=("parallel",),
            vmem_limit_bytes=32 * 1024 * 1024),
    )(x2, w32, b2, c_n)

    # Tiny transpose back to (bs, nc, top_k); fuses with the consumer under jit.
    probs = probs_t.T.reshape(bs, nc, top_k)
    idx = idx_t.T.reshape(bs, nc, top_k)
    return probs, idx


def _check(x, w, b, centers, top_k, probs, idx):
    """float64 numpy reference of the PyTorch forward; tie-robust comparison.

    Indices are validated by checking that the kernel-selected experts attain
    the reference top-k similarity values (so numerical near-ties cannot cause
    spurious failures); probabilities are checked against an exact softmax of
    those selected similarities.  Tolerances cover the MXU's f32 pass strategy.
    """
    bs, nc, din = x.shape
    M = bs * nc
    C = centers.shape[0]

    x2 = np.asarray(x, np.float64).reshape(M, din)
    w64 = np.asarray(w, np.float64)
    b64 = np.asarray(b, np.float64)
    c64 = np.asarray(centers, np.float64)

    xp = x2 @ w64 + b64
    xn = xp / np.maximum(np.linalg.norm(xp, axis=-1, keepdims=True), 1e-12)
    cn = c64 / np.maximum(np.linalg.norm(c64, axis=-1, keepdims=True), 1e-12)
    sim = xn @ cn.T                                              # (M, C)
    ref_vals = -np.sort(-sim, axis=-1)[:, :top_k]                # descending

    k_idx = np.asarray(idx).reshape(M, top_k)
    k_probs = np.asarray(probs).reshape(M, top_k)

    assert k_idx.min() >= 0 and k_idx.max() < C, "expert index out of range"
    if top_k > 1:
        srt = np.sort(k_idx, axis=-1)
        assert np.all(srt[:, 1:] != srt[:, :-1]), "duplicate expert indices"

    sel = np.take_along_axis(sim, k_idx, axis=-1)                # (M, K)
    assert np.allclose(sel, ref_vals, atol=2e-2), "top-k similarity mismatch"
    assert np.all(np.diff(sel, axis=-1) <= 2e-2), "top-k not descending"

    e = np.exp(sel - sel[:, :1])
    ref_probs = e / e.sum(-1, keepdims=True)
    assert np.allclose(k_probs, ref_probs, atol=2e-2), "probs mismatch"
    assert np.allclose(k_probs.sum(-1), 1.0, atol=1e-5), "probs don't sum to 1"


if __name__ == "__main__":
    # Module hyper-params (deterministic synthetic init, mirrors CosineRouter).
    time_dim = 16
    channels = 8           # number of experts (rows of expert_centers)
    expert_dim = 32
    top_k = 2
    din = time_dim * 2

    key = jax.random.PRNGKey(0)
    k1, k2, k3, k4, k5 = jax.random.split(key, 5)

    # expert_centers = torch.randn(channels, expert_dim)
    expert_centers = jax.random.normal(k1, (channels, expert_dim), jnp.float32)
    # nn.Linear(din, expert_dim): stored pre-transposed as (din, expert_dim),
    # uniform(+-1/sqrt(din)) init like torch.
    bound = 1.0 / np.sqrt(din)
    w = jax.random.uniform(k2, (din, expert_dim), jnp.float32, -bound, bound)
    b = jax.random.uniform(k3, (expert_dim,), jnp.float32, -bound, bound)

    # Small shape implied by the module: (bs=2, num_channels=4, time_dim*2=32).
    x_small = jax.random.normal(k4, (2, 4, din), jnp.float32)
    probs, idx = cosine_router(x_small, w, b, expert_centers, top_k=top_k)
    jax.block_until_ready((probs, idx))
    assert probs.shape == (2, 4, top_k) and idx.shape == (2, 4, top_k)
    _check(x_small, w, b, expert_centers, top_k, probs, idx)

    # Larger batch to exercise the tiled, multi-step grid path (grid >= 4).
    x_big = jax.random.normal(k5, (4, 512, din), jnp.float32)
    probs_b, idx_b = cosine_router(x_big, w, b, expert_centers, top_k=top_k)
    jax.block_until_ready((probs_b, idx_b))
    _check(x_big, w, b, expert_centers, top_k, probs_b, idx_b)

    print("KERNEL_OK")
</pallas_src>

<mosaic_0001>
module attributes {stable_mosaic.version = 11 : i64} {
  func.func @_router_kernel(%arg0: i32, %arg1: memref<8x32xf32, #tpu.memory_space<vmem>>, %arg2: memref<32x32xf32, #tpu.memory_space<vmem>>, %arg3: memref<1x32xf32, #tpu.memory_space<vmem>>, %arg4: memref<8x32xf32, #tpu.memory_space<vmem>>, %arg5: memref<2x8xf32, #tpu.memory_space<vmem>>, %arg6: memref<2x8xi32, #tpu.memory_space<vmem>>) attributes {dimension_semantics = [#tpu.dimension_semantics<parallel>], iteration_bounds = array<i64: 1>, scalar_prefetch = 0 : i64, scratch_operands = 0 : i64, tpu.core_type = #tpu.core_type<tc>, window_params = [{transform_indices = @transform_0, window_bounds = array<i64: 8, 32>}, {pipeline_mode = #tpu.pipeline_mode<synchronous>, transform_indices = @transform_1, window_bounds = array<i64: 32, 32>}, {pipeline_mode = #tpu.pipeline_mode<synchronous>, transform_indices = @transform_2, window_bounds = array<i64: 1, 32>}, {pipeline_mode = #tpu.pipeline_mode<synchronous>, transform_indices = @transform_3, window_bounds = array<i64: 8, 32>}, {transform_indices = @transform_4, window_bounds = array<i64: 2, 8>}, {transform_indices = @transform_5, window_bounds = array<i64: 2, 8>}]} {
    %c0 = arith.constant 0 : index
    %c0_0 = arith.constant 0 : index
    %0 = vector.load %arg1[%c0, %c0_0] : memref<8x32xf32, #tpu.memory_space<vmem>>, vector<8x32xf32>
    %c0_1 = arith.constant 0 : index
    %c0_2 = arith.constant 0 : index
    %1 = vector.load %arg2[%c0_1, %c0_2] : memref<32x32xf32, #tpu.memory_space<vmem>>, vector<32x32xf32>
    %cst = arith.constant dense<0.000000e+00> : vector<8x32xf32>
    %2 = tpu.matmul %0, %1, %cst {dimension_numbers = #tpu.dot_dimension_numbers<[1], [0], [0], [1], [0, 0, 1, 1], [], []>} : vector<8x32xf32>, vector<32x32xf32>, vector<8x32xf32> -> vector<8x32xf32>
    %c0_3 = arith.constant 0 : index
    %c0_4 = arith.constant 0 : index
    %3 = vector.load %arg3[%c0_3, %c0_4] : memref<1x32xf32, #tpu.memory_space<vmem>>, vector<1x32xf32>
    %4 = vector.broadcast %3 : vector<1x32xf32> to vector<8x32xf32>
    %5 = arith.addf %2, %4 : vector<8x32xf32>
    %6 = arith.mulf %5, %5 : vector<8x32xf32>
    %cst_5 = arith.constant dense<0.000000e+00> : vector<8xf32>
    %7 = vector.multi_reduction <add>, %6, %cst_5 [1] : vector<8x32xf32> to vector<8xf32>
    %8 = vector.shape_cast %7 : vector<8xf32> to vector<8x1xf32>
    %cst_6 = arith.constant 1.000000e-24 : f32
    %9 = vector.broadcast %cst_6 : f32 to vector<8x1xf32>
    %10 = arith.maximumf %8, %9 : vector<8x1xf32>
    %11 = math.rsqrt %10 : vector<8x1xf32>
    %12 = vector.broadcast %11 : vector<8x1xf32> to vector<8x32xf32>
    %13 = arith.mulf %5, %12 : vector<8x32xf32>
    %c0_7 = arith.constant 0 : index
    %c0_8 = arith.constant 0 : index
    %14 = vector.load %arg4[%c0_7, %c0_8] : memref<8x32xf32, #tpu.memory_space<vmem>>, vector<8x32xf32>
    %cst_9 = arith.constant dense<0.000000e+00> : vector<8x8xf32>
    %15 = tpu.matmul %14, %13, %cst_9 {dimension_numbers = #tpu.dot_dimension_numbers<[1], [1], [0], [0], [0, 0, 1, 0], [], []>} : vector<8x32xf32>, vector<8x32xf32>, vector<8x8xf32> -> vector<8x8xf32>
    %16 = tpu.iota {dimensions = array<i32: 0>} : vector<8x8xi32>
    %cst_10 = arith.constant dense<0xFF800000> : vector<8xf32>
    %17 = vector.multi_reduction <maximumf>, %15, %cst_10 [0] : vector<8x8xf32> to vector<8xf32>
    %18 = vector.shape_cast %17 : vector<8xf32> to vector<1x8xf32>
    %19 = vector.broadcast %18 : vector<1x8xf32> to vector<8x8xf32>
    %20 = arith.cmpf oge, %15, %19 : vector<8x8xf32>
    %c8_i32 = arith.constant 8 : i32
    %21 = vector.broadcast %c8_i32 : i32 to vector<8x8xi32>
    %22 = arith.select %20, %16, %21 : vector<8x8xi1>, vector<8x8xi32>
    %cst_11 = arith.constant dense<2147483647> : vector<8xi32>
    %23 = vector.multi_reduction <minsi>, %22, %cst_11 [0] : vector<8x8xi32> to vector<8xi32>
    %24 = vector.shape_cast %23 : vector<8xi32> to vector<1x8xi32>
    %25 = vector.broadcast %24 : vector<1x8xi32> to vector<8x8xi32>
    %26 = arith.cmpi eq, %16, %25 : vector<8x8xi32>
    %cst_12 = arith.constant 0xFF800000 : f32
    %27 = vector.broadcast %cst_12 : f32 to vector<8x8xf32>
    %28 = arith.select %26, %27, %15 : vector<8x8xi1>, vector<8x8xf32>
    %cst_13 = arith.constant dense<0xFF800000> : vector<8xf32>
    %29 = vector.multi_reduction <maximumf>, %28, %cst_13 [0] : vector<8x8xf32> to vector<8xf32>
    %30 = vector.shape_cast %29 : vector<8xf32> to vector<1x8xf32>
    %31 = vector.broadcast %30 : vector<1x8xf32> to vector<8x8xf32>
    %32 = arith.cmpf oge, %28, %31 : vector<8x8xf32>
    %c8_i32_14 = arith.constant 8 : i32
    %33 = vector.broadcast %c8_i32_14 : i32 to vector<8x8xi32>
    %34 = arith.select %32, %16, %33 : vector<8x8xi1>, vector<8x8xi32>
    %cst_15 = arith.constant dense<2147483647> : vector<8xi32>
    %35 = vector.multi_reduction <minsi>, %34, %cst_15 [0] : vector<8x8xi32> to vector<8xi32>
    %36 = vector.shape_cast %35 : vector<8xi32> to vector<1x8xi32>
    %37 = tpu.concatenate %18, %30 in 0 : vector<1x8xf32>, vector<1x8xf32> -> vector<2x8xf32>
    %38 = tpu.concatenate %24, %36 in 0 : vector<1x8xi32>, vector<1x8xi32> -> vector<2x8xi32>
    %39 = vector.extract_strided_slice %37 {offsets = [0, 0], sizes = [1, 8], strides = [1, 1]} : vector<2x8xf32> to vector<1x8xf32>
    %40 = vector.broadcast %39 : vector<1x8xf32> to vector<2x8xf32>
    %41 = arith.subf %37, %40 : vector<2x8xf32>
    %42 = math.exp %41 : vector<2x8xf32>
    %cst_16 = arith.constant dense<0.000000e+00> : vector<8xf32>
    %43 = vector.multi_reduction <add>, %42, %cst_16 [0] : vector<2x8xf32> to vector<8xf32>
    %44 = vector.shape_cast %43 : vector<8xf32> to vector<1x8xf32>
    %45 = vector.broadcast %44 : vector<1x8xf32> to vector<2x8xf32>
    %46 = arith.divf %42, %45 : vector<2x8xf32>
    %c0_17 = arith.constant 0 : index
    %c0_18 = arith.constant 0 : index
    %47 = vector.load %arg5[%c0_17, %c0_18] : memref<2x8xf32, #tpu.memory_space<vmem>>, vector<2x8xf32>
    tpu.vector_store %arg5[%c0_17, %c0_18], %46 {strides = array<i32>} : memref<2x8xf32, #tpu.memory_space<vmem>>, vector<2x8xf32>,
    %c0_19 = arith.constant 0 : index
    %c0_20 = arith.constant 0 : index
    %48 = vector.load %arg6[%c0_19, %c0_20] : memref<2x8xi32, #tpu.memory_space<vmem>>, vector<2x8xi32>
    tpu.vector_store %arg6[%c0_19, %c0_20], %38 {strides = array<i32>} : memref<2x8xi32, #tpu.memory_space<vmem>>, vector<2x8xi32>,
    return
  }
  func.func @transform_0(%arg0: i32) -> (i32, i32) {
    %c0_i32 = arith.constant 0 : i32
    %c0_i32_0 = arith.constant 0 : i32
    return %arg0, %c0_i32 : i32, i32
  }
  func.func @transform_1(%arg0: i32) -> (i32, i32) {
    %c0_i32 = arith.constant 0 : i32
    %c0_i32_0 = arith.constant 0 : i32
    %c0_i32_1 = arith.constant 0 : i32
    return %c0_i32, %c0_i32_0 : i32, i32
  }
  func.func @transform_2(%arg0: i32) -> (i32, i32) {
    %c0_i32 = arith.constant 0 : i32
    %c0_i32_0 = arith.constant 0 : i32
    %c0_i32_1 = arith.constant 0 : i32
    return %c0_i32, %c0_i32_0 : i32, i32
  }
  func.func @transform_3(%arg0: i32) -> (i32, i32) {
    %c0_i32 = arith.constant 0 : i32
    %c0_i32_0 = arith.constant 0 : i32
    %c0_i32_1 = arith.constant 0 : i32
    return %c0_i32, %c0_i32_0 : i32, i32
  }
  func.func @transform_4(%arg0: i32) -> (i32, i32) {
    %c0_i32 = arith.constant 0 : i32
    %c0_i32_0 = arith.constant 0 : i32
    return %c0_i32, %arg0 : i32, i32
  }
  func.func @transform_5(%arg0: i32) -> (i32, i32) {
    %c0_i32 = arith.constant 0 : i32
    %c0_i32_0 = arith.constant 0 : i32
    return %c0_i32, %arg0 : i32, i32
  }
}

</mosaic_0001>

<llo_original>
// kernel: cosine_router.1
$region0: #{cosine_router.1}
  #allocation0 [shape = 'u32[]', space=smem, size = 0x4, offset = 0x4, fixed_abs, tag = 'smem constant byte address 0x4 - core index']
  #allocation1 [shape = 'u32[144,128]{1,0:T(1,128)}', space=vmem, size = 0x12000, scoped, tag = 'internal scratch']
  %s0 = inlined_call_operand.hbm [shape: f32[8,32], index: 0, kind: input, shape index: {}]
  %s1 = inlined_call_operand.vmem [shape: f32[32,32], index: 1, kind: input, shape index: {}]
  %s2 = inlined_call_operand.vmem [shape: f32[1,32], index: 2, kind: input, shape index: {}]
  %s3 = inlined_call_operand.vmem [shape: f32[8,32], index: 3, kind: input, shape index: {}]
  %s4 = inlined_call_operand.vmem [shape: f32[2,8], index: 4, kind: output, shape index: {0}]
  %s5 = inlined_call_operand.vmem [shape: s32[2,8], index: 5, kind: output, shape index: {1}]
  %6 = xla_tuple %s4, %s5
  %s7 = sld [smem:[#allocation0]]
  $region38: #{cosine_router.1} parent=0
    _
  %s9 = ssub.s32 1, %s7
  %s10 = scalar_select 0, %s9, %s7
  $region1: #{cosine_router.1} parent=0
    #allocation2 [shape = 'u8[4096]{0}', space=vmem, size = 0x1000, scoped, tag = 'input window, operand 0, single buffered']
    #allocation3 [shape = 's32[1]{0}', space=sflag, size = 0x4, scoped, tag = 'scoped memory for cosine_router.1']
    %11 = vsyncpa [#allocation3], 0
    // Predicated region
    $region2: #{cosine_router.1} parent=1 // pred_check
      _
    $region3: #{cosine_router.1} parent=1 // pred_check_branch
      %13 = sbr.rel (0) target = $region5
    $region4: #{cosine_router.1} parent=1 // pred_region
      %s15 = ssub.s32 128, 128
      %16 = vsyncadd [#allocation3], %s15
      %s18 = sshll.u32 [#allocation2], 4
      %s19 = int_to_ptr.vmem [resolvable:$true] %s18
      %21 = dma.hbm_to_vmem [thread:$0]  %s0, 128, %s19, [#allocation3]
    $region5: #{cosine_router.1} parent=1 // pred_fallthru
      _
    // Predicated region
    $region6: #{cosine_router.1} parent=1 // pred_check
      _
    $region7: #{cosine_router.1} parent=1 // pred_check_branch
      %23 = sbr.rel (0) target = $region9
    $region8: #{cosine_router.1} parent=1 // pred_region
      _
    $region9: #{cosine_router.1} parent=1 // pred_fallthru
      _
    // Predicated region
    $region10: #{cosine_router.1} parent=1 // pred_check
      _
    $region11: #{cosine_router.1} parent=1 // pred_check_branch
      %25 = sbr.rel (0) target = $region13
    $region12: #{cosine_router.1} parent=1 // pred_region
      _
    $region13: #{cosine_router.1} parent=1 // pred_fallthru
      _
    // Predicated region
    $region14: #{cosine_router.1} parent=1 // pred_check
      _
    $region15: #{cosine_router.1} parent=1 // pred_check_branch
      %27 = sbr.rel (0) target = $region17
    $region16: #{cosine_router.1} parent=1 // pred_region
      _
    $region17: #{cosine_router.1} parent=1 // pred_fallthru
      _
    // Predicated region
    $region18: #{cosine_router.1} parent=1 // pred_check
      _
    $region19: #{cosine_router.1} parent=1 // pred_check_branch
      %29 = sbr.rel (0) target = $region21
    $region20: #{cosine_router.1} parent=1 // pred_region
      %30 = dma.done [#allocation3], 128
    $region21: #{cosine_router.1} parent=1 // pred_fallthru
      _
    %v31 = vld [vmem:[#allocation2] sm:$0xff]
    %v32 = vld [vmem:[%s1] sm:$0xff]
    %v33 = vld [vmem:[%s1 + $0x8] sm:$0xff]
    %v34 = vld [vmem:[%s1 + $0x10] sm:$0xff]
    %v35 = vld [vmem:[%s1 + $0x18] sm:$0xff]
    %v36 = vld [vmem:[%s2] sm:$0x1]
    %v38 = vlaneseq
    %v39 = vshrl.u32 %v38, 7
    %v40 = vsub.s32 0, %v39
    %v41 = vrot.slane %v36, %v40
    %vm43 = vcmask 261120
    %v45 = vsel %vm43, %v31, 0
    %47 = vmatprep.subr.mxu0 0.0
    %48 = vmatpush1.msra.mxu0 0.0
    %49 = vmatprep.subr.mxu0 0.0
    %50 = vmatpush1.msra.mxu0 0.0
    %51 = vmatprep.subr.mxu0 0.0
    %52 = vmatpush1.msra.mxu0 0.0
    %53 = vmatprep.subr.mxu0 0.0
    %54 = vmatpush1.msra.mxu0 0.0
    %55 = vmatprep.subr.mxu0 0.0
    %56 = vmatpush1.msra.mxu0 0.0
    %57 = vmatprep.subr.mxu0 0.0
    %58 = vmatpush1.msra.mxu0 0.0
    %59 = vmatprep.subr.mxu0 0.0
    %60 = vmatpush1.msra.mxu0 0.0
    %61 = vmatprep.subr.mxu0 0.0
    %62 = vmatpush1.msra.mxu0 0.0
    %63 = vmatprep.subr.mxu0 0.0
    %64 = vmatpush1.msra.mxu0 0.0
    %65 = vmatprep.subr.mxu0 0.0
    %66 = vmatpush1.msra.mxu0 0.0
    %67 = vmatprep.subr.mxu0 0.0
    %68 = vmatpush1.msra.mxu0 0.0
    %69 = vmatprep.subr.mxu0 0.0
    %70 = vmatpush1.msra.mxu0 0.0
    %71 = vmatprep.subr.mxu0 0.0
    %72 = vmatpush1.msra.mxu0 %v35
    %73 = vmatprep.subr.mxu0 0.0
    %74 = vmatpush1.msra.mxu0 %v34
    %75 = vmatprep.subr.mxu0 0.0
    %76 = vmatpush1.msra.mxu0 %v33
    %77 = vmatprep.subr.mxu0 0.0
    %78 = vmatpush1.msra.mxu0 %v32
    %79 = vmatprep.subr.mxu0 0.0
    %80 = vmatpush2.msra.mxu0 0.0
    %81 = vmatprep.subr.mxu0 0.0
    %82 = vmatpush2.msra.mxu0 0.0
    %83 = vmatprep.subr.mxu0 0.0
    %84 = vmatpush2.msra.mxu0 0.0
    %85 = vmatprep.subr.mxu0 0.0
    %86 = vmatpush2.msra.mxu0 0.0
    %87 = vmatprep.subr.mxu0 0.0
    %88 = vmatpush2.msra.mxu0 0.0
    %89 = vmatprep.subr.mxu0 0.0
    %90 = vmatpush2.msra.mxu0 0.0
    %91 = vmatprep.subr.mxu0 0.0
    %92 = vmatpush2.msra.mxu0 0.0
    %93 = vmatprep.subr.mxu0 0.0
    %94 = vmatpush2.msra.mxu0 0.0
    %95 = vmatprep.subr.mxu0 0.0
    %96 = vmatpush2.msra.mxu0 0.0
    %97 = vmatprep.subr.mxu0 0.0
    %98 = vmatpush2.msra.mxu0 0.0
    %99 = vmatprep.subr.mxu0 0.0
    %100 = vmatpush2.msra.mxu0 0.0
    %101 = vmatprep.subr.mxu0 0.0
    %102 = vmatpush2.msra.mxu0 0.0
    %103 = vmatprep.subr.mxu0 0.0
    %104 = vmatpush2.msra.mxu0 0.0
    %105 = vmatprep.subr.mxu0 0.0
    %106 = vmatpush2.msra.mxu0 0.0
    %107 = vmatprep.subr.mxu0 0.0
    %108 = vmatpush2.msra.mxu0 0.0
    %109 = vmatprep.subr.mxu0 0.0
    %110 = vmatpush2.msra.mxu0 0.0
    %111 = vmatprep.mubr.f32.mxu0 0.0
    %112 = vmatmul.mubr.f32.gmra.mxu0 %v45
    %v113 = vpop.f32.mrf.mxu0
    %v114 = vadd.f32 %v41, %v113
    %v115 = vpop.f32.mrf.mxu0
    %116 = vdwg.mxu0
    %v117 = vmul.f32 %v114, %v114
    %v118 = vsel %vm43, %v117, 0.0
    %119 = vadd.xlane.f32.xlu0 %v118
    %v120 = vpop.xlane.xlu0 %119
    %v121 = vmax.f32 %v120, 1e-24
    %v122 = vrsqrt.pop %v121
    %v123 = vmul.f32 %v114, %v122
    %v124 = vld [vmem:[%s3] sm:$0xff]
    %v126 = vsel %vm43, %v124, 0
    %v129 = vsel %vm43, %v123, 0
    %131 = vmatprep.subr.mxu0 0.0
    %132 = vmatpush1.xpose.msra.mxu0 0.0
    %133 = vmatprep.subr.mxu0 0.0
    %134 = vmatpush1.xpose.msra.mxu0 0.0
    %135 = vmatprep.subr.mxu0 0.0
    %136 = vmatpush1.xpose.msra.mxu0 0.0
    %137 = vmatprep.subr.mxu0 0.0
    %138 = vmatpush1.xpose.msra.mxu0 0.0
    %139 = vmatprep.subr.mxu0 0.0
    %140 = vmatpush1.xpose.msra.mxu0 0.0
    %141 = vmatprep.subr.mxu0 0.0
    %142 = vmatpush1.xpose.msra.mxu0 0.0
    %143 = vmatprep.subr.mxu0 0.0
    %144 = vmatpush1.xpose.msra.mxu0 0.0
    %145 = vmatprep.subr.mxu0 0.0
    %146 = vmatpush1.xpose.msra.mxu0 0.0
    %147 = vmatprep.subr.mxu0 0.0
    %148 = vmatpush1.xpose.msra.mxu0 0.0
    %149 = vmatprep.subr.mxu0 0.0
    %150 = vmatpush1.xpose.msra.mxu0 0.0
    %151 = vmatprep.subr.mxu0 0.0
    %152 = vmatpush1.xpose.msra.mxu0 0.0
    %153 = vmatprep.subr.mxu0 0.0
    %154 = vmatpush1.xpose.msra.mxu0 0.0
    %155 = vmatprep.subr.mxu0 0.0
    %156 = vmatpush1.xpose.msra.mxu0 0.0
    %157 = vmatprep.subr.mxu0 0.0
    %158 = vmatpush1.xpose.msra.mxu0 0.0
    %159 = vmatprep.subr.mxu0 0.0
    %160 = vmatpush1.xpose.msra.mxu0 0.0
    %161 = vmatprep.subr.mxu0 0.0
    %162 = vmatpush1.xpose.msra.mxu0 %v129
    %163 = vmatprep.subr.mxu0 0.0
    %164 = vmatpush2.xpose.msra.mxu0 0.0
    %165 = vmatprep.subr.mxu0 0.0
    %166 = vmatpush2.xpose.msra.mxu0 0.0
    %167 = vmatprep.subr.mxu0 0.0
    %168 = vmatpush2.xpose.msra.mxu0 0.0
    %169 = vmatprep.subr.mxu0 0.0
    %170 = vmatpush2.xpose.msra.mxu0 0.0
    %171 = vmatprep.subr.mxu0 0.0
    %172 = vmatpush2.xpose.msra.mxu0 0.0
    %173 = vmatprep.subr.mxu0 0.0
    %174 = vmatpush2.xpose.msra.mxu0 0.0
    %175 = vmatprep.subr.mxu0 0.0
    %176 = vmatpush2.xpose.msra.mxu0 0.0
    %177 = vmatprep.subr.mxu0 0.0
    %178 = vmatpush2.xpose.msra.mxu0 0.0
    %179 = vmatprep.subr.mxu0 0.0
    %180 = vmatpush2.xpose.msra.mxu0 0.0
    %181 = vmatprep.subr.mxu0 0.0
    %182 = vmatpush2.xpose.msra.mxu0 0.0
    %183 = vmatprep.subr.mxu0 0.0
    %184 = vmatpush2.xpose.msra.mxu0 0.0
    %185 = vmatprep.subr.mxu0 0.0
    %186 = vmatpush2.xpose.msra.mxu0 0.0
    %187 = vmatprep.subr.mxu0 0.0
    %188 = vmatpush2.xpose.msra.mxu0 0.0
    %189 = vmatprep.subr.mxu0 0.0
    %190 = vmatpush2.xpose.msra.mxu0 0.0
    %191 = vmatprep.subr.mxu0 0.0
    %192 = vmatpush2.xpose.msra.mxu0 0.0
    %193 = vmatprep.subr.mxu0 0.0
    %194 = vmatpush2.xpose.msra.mxu0 0.0
    %195 = vmatprep.mubr.f32.mxu0 0.0
    %196 = vmatmul.mubr.f32.gmra.mxu0 %v126
    %v197 = vpop.f32.mrf.mxu0
    %v198 = vadd.f32 0.0, %v197
    %v199 = vpop.f32.mrf.mxu0
    %200 = vdwg.mxu0
    %v201 = vlaneseq
    %v202 = vshrl.u32 %v201, 7
    %vm203 = vcmask 64512
    %v204 = vsel %vm203, %v198, -inf
    %v205 = vrot.slane %v204, 4
    %v206 = vmax.f32 %v204, %v205
    %v207 = vrot.slane %v206, 2
    %v208 = vmax.f32 %v206, %v207
    %v209 = vrot.slane %v208, 1
    %v210 = vmax.f32 %v208, %v209
    %vm211 = vcmp.ge.f32.partialorder %v198, %v210
    %v212 = vsel %vm211, %v202, 8
    %v213 = vsel %vm203, %v212, 2147483647
    %v214 = vrot.slane %v213, 4
    %vm215 = vcmp.lt.s32.totalorder %v213, %v214
    %v216 = vsel %vm215, %v213, %v214
    %v217 = vrot.slane %v216, 2
    %vm218 = vcmp.lt.s32.totalorder %v216, %v217
    %v219 = vsel %vm218, %v216, %v217
    %v220 = vrot.slane %v219, 1
    %vm221 = vcmp.lt.s32.totalorder %v219, %v220
    %v222 = vsel %vm221, %v219, %v220
    %vm223 = vcmp.eq.s32.totalorder %v202, %v222
    %v224 = vsel %vm223, -inf, %v198
    %v225 = vsel %vm203, %v224, -inf
    %v226 = vrot.slane %v225, 4
    %v227 = vmax.f32 %v225, %v226
    %v228 = vrot.slane %v227, 2
    %v229 = vmax.f32 %v227, %v228
    %v230 = vrot.slane %v229, 1
    %v231 = vmax.f32 %v229, %v230
    %vm232 = vcmp.ge.f32.partialorder %v224, %v231
    %v233 = vsel %vm232, %v202, 8
    %v234 = vsel %vm203, %v233, 2147483647
    %v235 = vrot.slane %v234, 4
    %vm236 = vcmp.lt.s32.totalorder %v234, %v235
    %v237 = vsel %vm236, %v234, %v235
    %v238 = vrot.slane %v237, 2
    %vm239 = vcmp.lt.s32.totalorder %v237, %v238
    %v240 = vsel %vm239, %v237, %v238
    %v241 = vrot.slane %v240, 1
    %vm242 = vcmp.lt.s32.totalorder %v240, %v241
    %v243 = vsel %vm242, %v240, %v241
    %vm244 = vcmask 1040384
    %v245 = vsel %vm244, %v210, %v231
    %v246 = vsel %vm244, %v222, %v243
    %v247 = vlaneseq
    %v248 = vshrl.u32 %v247, 7
    %v249 = vsub.s32 0, %v248
    %v250 = vrot.slane %v245, %v249
    %v251 = vsub.f32 %v245, %v250
    %v252 = vmul.f32 %v251, 1.442695
    %v253 = vpow.pop %v252
    %vm254 = vcmask 58368
    %v255 = vsel %vm254, %v253, 0.0
    %v256 = vrot.slane %v255, 4
    %v257 = vadd.f32 %v255, %v256
    %v258 = vrot.slane %v257, 2
    %v259 = vadd.f32 %v257, %v258
    %v260 = vrot.slane %v259, 1
    %v261 = vadd.f32 %v259, %v260
    %v262 = vrcp.pop %v261
    %v263 = vmul.f32 %v253, %v262
    %264 = vst.msk [vmem:[%s4] sm:$0x3] %vm254, %v263
    %265 = vst.msk [vmem:[%s5] sm:$0x3] %vm254, %v246
    // Predicated region
    $region22: #{cosine_router.1} parent=1 // pred_check
      _
    $region23: #{cosine_router.1} parent=1 // pred_check_branch
      %267 = sbr.rel (0) target = $region25
    $region24: #{cosine_router.1} parent=1 // pred_region
      _
    $region25: #{cosine_router.1} parent=1 // pred_fallthru
      _
    // Predicated region
    $region26: #{cosine_router.1} parent=1 // pred_check
      _
    $region27: #{cosine_router.1} parent=1 // pred_check_branch
      %269 = sbr.rel (0) target = $region29
    $region28: #{cosine_router.1} parent=1 // pred_region
      _
    $region29: #{cosine_router.1} parent=1 // pred_fallthru
      _
    // Predicated region
    $region30: #{cosine_router.1} parent=1 // pred_check
      _
    $region31: #{cosine_router.1} parent=1 // pred_check_branch
      %271 = sbr.rel (0) target = $region33
    $region32: #{cosine_router.1} parent=1 // pred_region
      _
    $region33: #{cosine_router.1} parent=1 // pred_fallthru
      _
    // Predicated region
    $region34: #{cosine_router.1} parent=1 // pred_check
      _
    $region35: #{cosine_router.1} parent=1 // pred_check_branch
      %273 = sbr.rel (0) target = $region37
    $region36: #{cosine_router.1} parent=1 // pred_region
      _
    $region37: #{cosine_router.1} parent=1 // pred_fallthru
      _
    %274 = vsyncpa [#allocation3], 1

</llo_original>
